<compile_context>
chip_gen: v5e
topology: v5e:2x2
jax: 0.10.0
libtpu: 0.0.40
codegen_flags: <defaults>
</compile_context>

<pallas_src>
import numpy as np
import jax
import jax.numpy as jnp
from jax.experimental import pallas as pl
from jax.experimental.pallas import tpu as pltpu

SLOPE = 5.0           # LOUPESampler default slope
ENTROPY_EPS = 1e-10   # eps in _mask_neg_entropy


# ----------------------------------------------------------------------------------
# Fused kernel: (mask gen at b==0, kept resident) + masked_kspace = bin_mask * kspace
# All mask arrays live in the channel-interleaved (H, 2W) layout so they broadcast
# directly against the (H, 2W) kspace slab of the current batch element.
# ----------------------------------------------------------------------------------
def _loupe_fused_kernel(sparsity_ref, param_ref, u_ref, k_ref,
                        masked_ref, prob_ref, resc_ref, bin_ref, ent_ref):
    # Mask generation only once.  The four mask outputs use a constant index_map, so
    # their blocks stay resident in VMEM across the whole (sequential) batch grid and
    # are written back to HBM exactly once at the end.
    @pl.when(pl.program_id(0) == 0)
    def _():
        sparsity = sparsity_ref[0]

        # ProbMask.forward: sigmoid(slope * learnable_logits)
        logits = param_ref[...]
        prob = 1.0 / (1.0 + jnp.exp(-SLOPE * logits))
        prob_ref[...] = prob

        # RescaleProbMap (prob mask has batch 1 -> single global mean; duplicated
        # channel-interleaved entries do not change the mean).
        xbar = jnp.mean(prob)
        r = sparsity / xbar
        beta = (1.0 - sparsity) / (1.0 - xbar)
        rescaled = jnp.where(r <= 1.0, prob * r, 1.0 - (1.0 - prob) * beta)
        resc_ref[...] = rescaled

        # ThresholdRandomMaskSigmoidV1.forward: (x > Uniform(0,1)).float()
        # TODO(synk): PyTorch redraws the uniform noise until mean(binary) ~ mean(x)
        # (rejection loop); a single uniform draw (supplied by the wrapper) is used.
        bin_ref[...] = (rescaled > u_ref[...]).astype(jnp.float32)

        # _mask_neg_entropy on the rescaled mask
        ent_ref[...] = (rescaled * jnp.log(rescaled + ENTROPY_EPS)
                        + (1.0 - rescaled) * jnp.log(1.0 - rescaled + ENTROPY_EPS))

    # Apply the resident binarized mask to this batch element's kspace slab.
    masked_ref[...] = (bin_ref[...] * k_ref[...]).astype(masked_ref.dtype)


def _fftshift2(x):
    return jnp.roll(x, (x.shape[0] // 2, x.shape[1] // 2), axis=(0, 1))


# ----------------------------------------------------------------------------------
# LOUPESampler.forward equivalent
# ----------------------------------------------------------------------------------
def loupe_sampler_forward(mask_param, kspace, sparsity, key, vis_to_numpy=False):
    """mask_param: (H, W) learnable logits; kspace: (B, H, W, 2) NHWC like PyTorch.

    Returns (masked_kspace, binarized_mask, neg_entropy, data_to_vis_sampler).
    """
    B, H, W, C = kspace.shape
    assert C == 2 and mask_param.shape == (H, W)
    W2 = 2 * W

    # Channel-interleaved duplication of the tiny mask inputs so every elementwise op
    # in the kernel runs directly in the same (H, 2W) layout as kspace.reshape(B,H,2W).
    param2 = jnp.repeat(mask_param.astype(jnp.float32), 2, axis=-1)      # (H, 2W)
    u = jax.random.uniform(key, (H, W), dtype=jnp.float32)               # torch.uniform_()
    u2 = jnp.repeat(u, 2, axis=-1)                                       # (H, 2W)

    k_flat = kspace.reshape(B, H, W2)   # free contiguous NHWC view (channel minor)

    mask_struct = jax.ShapeDtypeStruct((H, W2), jnp.float32)
    const_mask_spec = pl.BlockSpec((H, W2), lambda b: (0, 0))            # resident block

    masked_flat, prob2, resc2, bin2, ent2 = pl.pallas_call(
        _loupe_fused_kernel,
        grid=(B,),
        in_specs=[
            pl.BlockSpec(memory_space=pltpu.MemorySpace.SMEM),           # sparsity (1,)
            const_mask_spec,                                             # logits
            const_mask_spec,                                             # uniform noise
            pl.BlockSpec((None, H, W2), lambda b: (b, 0, 0)),            # kspace slab
        ],
        out_specs=(
            pl.BlockSpec((None, H, W2), lambda b: (b, 0, 0)),            # masked kspace
            const_mask_spec,                                             # prob
            const_mask_spec,                                             # rescaled
            const_mask_spec,                                             # binarized
            const_mask_spec,                                             # neg-entropy
        ),
        out_shape=(
            jax.ShapeDtypeStruct((B, H, W2), kspace.dtype),
            mask_struct, mask_struct, mask_struct, mask_struct,
        ),
        # Batch axis must be "arbitrary": step 0 produces the mask that later steps
        # reuse from the resident output blocks.  For very large H*W on v7x, raise
        # vmem_limit_bytes or tile over H (mean first, elementwise second).
        compiler_params=pltpu.CompilerParams(dimension_semantics=("arbitrary",)),
    )(jnp.asarray([sparsity], jnp.float32), param2, u2, k_flat)

    masked_kspace = masked_flat.reshape(B, H, W, 2)

    def _deinterleave(x2):   # (H, 2W) channel-interleaved -> (1, H, W, 1)
        return x2.reshape(H, W, 2)[:, :, 0].reshape(1, H, W, 1)

    prob_mask = _deinterleave(prob2)
    rescaled_mask = _deinterleave(resc2)
    binarized_mask = _deinterleave(bin2)
    neg_entropy = _deinterleave(ent2)

    # Lazy by default: keep JAX arrays (no blocking device->host copy in the hot path).
    data_to_vis_sampler = {
        "prob_mask": _fftshift2(prob_mask[0, :, :, 0]),
        "rescaled_mask": _fftshift2(rescaled_mask[0, :, :, 0]),
        "binarized_mask": _fftshift2(binarized_mask[0, :, :, 0]),
    }
    if vis_to_numpy:
        data_to_vis_sampler = {k: np.asarray(v) for k, v in data_to_vis_sampler.items()}

    return masked_kspace, binarized_mask, neg_entropy, data_to_vis_sampler


# ----------------------------------------------------------------------------------
# Deterministic parameter init (ProbMask._slope_random_uniform)
# ----------------------------------------------------------------------------------
def init_prob_mask_param(key, shape, slope=SLOPE, eps=1e-2):
    temp = jax.random.uniform(key, shape, minval=eps, maxval=1.0 - eps,
                              dtype=jnp.float32)
    return -jnp.log(1.0 / temp - 1.0) / slope


if __name__ == "__main__":
    key = jax.random.PRNGKey(0)
    k_param, k_kspace, k_noise = jax.random.split(key, 3)

    B, H, W = 2, 16, 16
    sparsity = 0.25

    mask_param = init_prob_mask_param(k_param, (H, W))
    kspace = jax.random.normal(k_kspace, (B, H, W, 2), dtype=jnp.float32)

    masked_kspace, binarized_mask, neg_entropy, vis = loupe_sampler_forward(
        mask_param, kspace, sparsity, key=k_noise)
    jax.block_until_ready((masked_kspace, binarized_mask, neg_entropy))

    assert masked_kspace.shape == (B, H, W, 2)
    assert binarized_mask.shape == (1, H, W, 1)
    assert neg_entropy.shape == (1, H, W, 1)
    # masked kspace must be exactly kspace where mask==1 and 0 elsewhere
    ref = np.asarray(binarized_mask) * np.asarray(kspace)
    np.testing.assert_allclose(np.asarray(masked_kspace), ref, rtol=0, atol=0)
    print("KERNEL_OK")
</pallas_src>

<mosaic_0001>
module attributes {stable_mosaic.version = 11 : i64} {
  func.func @_loupe_fused_kernel(%arg0: i32, %arg1: memref<1xf32, #tpu.memory_space<smem>>, %arg2: memref<16x32xf32, #tpu.memory_space<vmem>>, %arg3: memref<16x32xf32, #tpu.memory_space<vmem>>, %arg4: memref<1x16x32xf32, #tpu.memory_space<vmem>>, %arg5: memref<1x16x32xf32, #tpu.memory_space<vmem>>, %arg6: memref<16x32xf32, #tpu.memory_space<vmem>>, %arg7: memref<16x32xf32, #tpu.memory_space<vmem>>, %arg8: memref<16x32xf32, #tpu.memory_space<vmem>>, %arg9: memref<16x32xf32, #tpu.memory_space<vmem>>) attributes {dimension_semantics = [#tpu.dimension_semantics<arbitrary>], iteration_bounds = array<i64: 2>, scalar_prefetch = 0 : i64, scratch_operands = 0 : i64, tpu.core_type = #tpu.core_type<tc>, window_params = [{transform_indices = @transform_0, window_bounds = array<i64: 1>}, {pipeline_mode = #tpu.pipeline_mode<synchronous>, transform_indices = @transform_1, window_bounds = array<i64: 16, 32>}, {pipeline_mode = #tpu.pipeline_mode<synchronous>, transform_indices = @transform_2, window_bounds = array<i64: 16, 32>}, {transform_indices = @transform_3, window_bounds = array<i64: 1, 16, 32>}, {transform_indices = @transform_4, window_bounds = array<i64: 1, 16, 32>}, {pipeline_mode = #tpu.pipeline_mode<synchronous>, transform_indices = @transform_5, window_bounds = array<i64: 16, 32>}, {pipeline_mode = #tpu.pipeline_mode<synchronous>, transform_indices = @transform_6, window_bounds = array<i64: 16, 32>}, {pipeline_mode = #tpu.pipeline_mode<synchronous>, transform_indices = @transform_7, window_bounds = array<i64: 16, 32>}, {pipeline_mode = #tpu.pipeline_mode<synchronous>, transform_indices = @transform_8, window_bounds = array<i64: 16, 32>}]} {
    %c0_i32 = arith.constant 0 : i32
    %0 = arith.cmpi eq, %arg0, %c0_i32 : i32
    %1 = arith.extui %0 : i1 to i32
    %c0_i32_0 = arith.constant 0 : i32
    %2 = arith.cmpi ne, %1, %c0_i32_0 : i32
    scf.if %2 {
      %c0_8 = arith.constant 0 : index
      %10 = memref.load %arg1[%c0_8] : memref<1xf32, #tpu.memory_space<smem>>
      %c0_9 = arith.constant 0 : index
      %c0_10 = arith.constant 0 : index
      %11 = vector.load %arg2[%c0_9, %c0_10] : memref<16x32xf32, #tpu.memory_space<vmem>>, vector<16x32xf32>
      %cst = arith.constant -5.000000e+00 : f32
      %12 = vector.broadcast %cst : f32 to vector<16x32xf32>
      %13 = arith.mulf %12, %11 : vector<16x32xf32>
      %14 = math.exp %13 : vector<16x32xf32>
      %cst_11 = arith.constant 1.000000e+00 : f32
      %15 = vector.broadcast %cst_11 : f32 to vector<16x32xf32>
      %16 = arith.addf %15, %14 : vector<16x32xf32>
      %cst_12 = arith.constant 1.000000e+00 : f32
      %17 = vector.broadcast %cst_12 : f32 to vector<16x32xf32>
      %18 = arith.divf %17, %16 : vector<16x32xf32>
      %c0_13 = arith.constant 0 : index
      %c0_14 = arith.constant 0 : index
      %19 = vector.load %arg6[%c0_13, %c0_14] : memref<16x32xf32, #tpu.memory_space<vmem>>, vector<16x32xf32>
      tpu.vector_store %arg6[%c0_13, %c0_14], %18 {strides = array<i32>} : memref<16x32xf32, #tpu.memory_space<vmem>>, vector<16x32xf32>,
      %20 = vector.shape_cast %18 : vector<16x32xf32> to vector<1x16x32xf32>
      %cst_15 = arith.constant dense<0.000000e+00> : vector<1xf32>
      %21 = vector.multi_reduction <add>, %20, %cst_15 [1, 2] : vector<1x16x32xf32> to vector<1xf32>
      %22 = vector.shape_cast %21 : vector<1xf32> to vector<1x1x1xf32>
      %23 = vector.extract %22[0, 0, 0] : f32 from vector<1x1x1xf32>
      %cst_16 = arith.constant 5.120000e+02 : f32
      %24 = arith.divf %23, %cst_16 : f32
      %25 = arith.divf %10, %24 : f32
      %cst_17 = arith.constant 1.000000e+00 : f32
      %26 = arith.subf %cst_17, %10 : f32
      %cst_18 = arith.constant 1.000000e+00 : f32
      %27 = arith.subf %cst_18, %24 : f32
      %28 = arith.divf %26, %27 : f32
      %cst_19 = arith.constant 1.000000e+00 : f32
      %29 = arith.cmpf ole, %25, %cst_19 : f32
      %30 = vector.broadcast %25 : f32 to vector<16x32xf32>
      %31 = arith.mulf %18, %30 : vector<16x32xf32>
      %cst_20 = arith.constant 1.000000e+00 : f32
      %32 = vector.broadcast %cst_20 : f32 to vector<16x32xf32>
      %33 = arith.subf %32, %18 : vector<16x32xf32>
      %34 = vector.broadcast %28 : f32 to vector<16x32xf32>
      %35 = arith.mulf %33, %34 : vector<16x32xf32>
      %cst_21 = arith.constant 1.000000e+00 : f32
      %36 = vector.broadcast %cst_21 : f32 to vector<16x32xf32>
      %37 = arith.subf %36, %35 : vector<16x32xf32>
      %38 = arith.select %29, %31, %37 : vector<16x32xf32>
      %c0_22 = arith.constant 0 : index
      %c0_23 = arith.constant 0 : index
      %39 = vector.load %arg7[%c0_22, %c0_23] : memref<16x32xf32, #tpu.memory_space<vmem>>, vector<16x32xf32>
      tpu.vector_store %arg7[%c0_22, %c0_23], %38 {strides = array<i32>} : memref<16x32xf32, #tpu.memory_space<vmem>>, vector<16x32xf32>,
      %c0_24 = arith.constant 0 : index
      %c0_25 = arith.constant 0 : index
      %40 = vector.load %arg3[%c0_24, %c0_25] : memref<16x32xf32, #tpu.memory_space<vmem>>, vector<16x32xf32>
      %41 = arith.cmpf ogt, %38, %40 : vector<16x32xf32>
      %42 = arith.extui %41 : vector<16x32xi1> to vector<16x32xi32>
      %43 = arith.sitofp %42 : vector<16x32xi32> to vector<16x32xf32>
      %c0_26 = arith.constant 0 : index
      %c0_27 = arith.constant 0 : index
      %44 = vector.load %arg8[%c0_26, %c0_27] : memref<16x32xf32, #tpu.memory_space<vmem>>, vector<16x32xf32>
      tpu.vector_store %arg8[%c0_26, %c0_27], %43 {strides = array<i32>} : memref<16x32xf32, #tpu.memory_space<vmem>>, vector<16x32xf32>,
      %cst_28 = arith.constant 1.000000e-10 : f32
      %45 = vector.broadcast %cst_28 : f32 to vector<16x32xf32>
      %46 = arith.addf %38, %45 : vector<16x32xf32>
      %47 = math.log %46 : vector<16x32xf32>
      %48 = arith.mulf %38, %47 : vector<16x32xf32>
      %cst_29 = arith.constant 1.000000e+00 : f32
      %49 = vector.broadcast %cst_29 : f32 to vector<16x32xf32>
      %50 = arith.subf %49, %38 : vector<16x32xf32>
      %cst_30 = arith.constant 1.000000e+00 : f32
      %51 = vector.broadcast %cst_30 : f32 to vector<16x32xf32>
      %52 = arith.subf %51, %38 : vector<16x32xf32>
      %cst_31 = arith.constant 1.000000e-10 : f32
      %53 = vector.broadcast %cst_31 : f32 to vector<16x32xf32>
      %54 = arith.addf %52, %53 : vector<16x32xf32>
      %55 = math.log %54 : vector<16x32xf32>
      %56 = arith.mulf %50, %55 : vector<16x32xf32>
      %57 = arith.addf %48, %56 : vector<16x32xf32>
      %c0_32 = arith.constant 0 : index
      %c0_33 = arith.constant 0 : index
      %58 = vector.load %arg9[%c0_32, %c0_33] : memref<16x32xf32, #tpu.memory_space<vmem>>, vector<16x32xf32>
      tpu.vector_store %arg9[%c0_32, %c0_33], %57 {strides = array<i32>} : memref<16x32xf32, #tpu.memory_space<vmem>>, vector<16x32xf32>,
    } else {
    }
    %c0 = arith.constant 0 : index
    %c0_1 = arith.constant 0 : index
    %3 = vector.load %arg8[%c0, %c0_1] : memref<16x32xf32, #tpu.memory_space<vmem>>, vector<16x32xf32>
    %c0_2 = arith.constant 0 : index
    %c0_3 = arith.constant 0 : index
    %c0_4 = arith.constant 0 : index
    %4 = vector.load %arg4[%c0_2, %c0_3, %c0_4] : memref<1x16x32xf32, #tpu.memory_space<vmem>>, vector<1x16x32xf32>
    %5 = vector.shape_cast %4 : vector<1x16x32xf32> to vector<16x32xf32>
    %6 = arith.mulf %3, %5 : vector<16x32xf32>
    %c0_5 = arith.constant 0 : index
    %c0_6 = arith.constant 0 : index
    %c0_7 = arith.constant 0 : index
    %7 = vector.load %arg5[%c0_5, %c0_6, %c0_7] : memref<1x16x32xf32, #tpu.memory_space<vmem>>, vector<1x16x32xf32>
    %8 = vector.shape_cast %7 : vector<1x16x32xf32> to vector<16x32xf32>
    %9 = vector.shape_cast %6 : vector<16x32xf32> to vector<1x16x32xf32>
    tpu.vector_store %arg5[%c0_5, %c0_6, %c0_7], %9 {strides = array<i32>} : memref<1x16x32xf32, #tpu.memory_space<vmem>>, vector<1x16x32xf32>,
    return
  }
  func.func @transform_0(%arg0: i32) -> i32 {
    %c0_i32 = arith.constant 0 : i32
    %c0_i32_0 = arith.constant 0 : i32
    return %c0_i32 : i32
  }
  func.func @transform_1(%arg0: i32) -> (i32, i32) {
    %c0_i32 = arith.constant 0 : i32
    %c0_i32_0 = arith.constant 0 : i32
    %c0_i32_1 = arith.constant 0 : i32
    return %c0_i32, %c0_i32_0 : i32, i32
  }
  func.func @transform_2(%arg0: i32) -> (i32, i32) {
    %c0_i32 = arith.constant 0 : i32
    %c0_i32_0 = arith.constant 0 : i32
    %c0_i32_1 = arith.constant 0 : i32
    return %c0_i32, %c0_i32_0 : i32, i32
  }
  func.func @transform_3(%arg0: i32) -> (i32, i32, i32) {
    %c0_i32 = arith.constant 0 : i32
    %c0_i32_0 = arith.constant 0 : i32
    %c0_i32_1 = arith.constant 0 : i32
    return %arg0, %c0_i32, %c0_i32_0 : i32, i32, i32
  }
  func.func @transform_4(%arg0: i32) -> (i32, i32, i32) {
    %c0_i32 = arith.constant 0 : i32
    %c0_i32_0 = arith.constant 0 : i32
    %c0_i32_1 = arith.constant 0 : i32
    return %arg0, %c0_i32, %c0_i32_0 : i32, i32, i32
  }
  func.func @transform_5(%arg0: i32) -> (i32, i32) {
    %c0_i32 = arith.constant 0 : i32
    %c0_i32_0 = arith.constant 0 : i32
    %c0_i32_1 = arith.constant 0 : i32
    return %c0_i32, %c0_i32_0 : i32, i32
  }
  func.func @transform_6(%arg0: i32) -> (i32, i32) {
    %c0_i32 = arith.constant 0 : i32
    %c0_i32_0 = arith.constant 0 : i32
    %c0_i32_1 = arith.constant 0 : i32
    return %c0_i32, %c0_i32_0 : i32, i32
  }
  func.func @transform_7(%arg0: i32) -> (i32, i32) {
    %c0_i32 = arith.constant 0 : i32
    %c0_i32_0 = arith.constant 0 : i32
    %c0_i32_1 = arith.constant 0 : i32
    return %c0_i32, %c0_i32_0 : i32, i32
  }
  func.func @transform_8(%arg0: i32) -> (i32, i32) {
    %c0_i32 = arith.constant 0 : i32
    %c0_i32_0 = arith.constant 0 : i32
    %c0_i32_1 = arith.constant 0 : i32
    return %c0_i32, %c0_i32_0 : i32, i32
  }
}

</mosaic_0001>

<llo_original>
// kernel: tpu_custom_call.1
$region0: #{tpu_custom_call.1}
  #allocation0 [shape = 'u32[]', space=smem, size = 0x4, offset = 0x4, fixed_abs, tag = 'smem constant byte address 0x4 - core index']
  #allocation1 [shape = 'u32[72,128]{1,0:T(1,128)}', space=vmem, size = 0x9000, scoped, tag = 'internal scratch']
  #allocation2 [shape = 'f32[1]{0:T(128)S(6)}', space=smem, size = 0x200, scoped, tag = 'scoped memory for tpu_custom_call.1']
  %s0 = inlined_call_operand.<no memory space> [shape: f32[1], index: 0, kind: input, shape index: {}]
  %s1 = inlined_call_operand.hbm [shape: f32[16,32], index: 1, kind: input, shape index: {}]
  %s2 = inlined_call_operand.hbm [shape: f32[16,32], index: 2, kind: input, shape index: {}]
  %s3 = inlined_call_operand.hbm [shape: f32[2,16,32], index: 3, kind: input, shape index: {}]
  %s4 = inlined_call_operand.hbm [shape: f32[2,16,32], index: 4, kind: output, shape index: {0}]
  %s5 = inlined_call_operand.hbm [shape: f32[16,32], index: 5, kind: output, shape index: {1}]
  %s6 = inlined_call_operand.hbm [shape: f32[16,32], index: 6, kind: output, shape index: {2}]
  %s7 = inlined_call_operand.hbm [shape: f32[16,32], index: 7, kind: output, shape index: {3}]
  %s8 = inlined_call_operand.hbm [shape: f32[16,32], index: 8, kind: output, shape index: {4}]
  %9 = xla_tuple %s4, %s5, %s6, %s7, %s8
  %s10 = sld [smem:[#allocation0]]
  $region97: #{tpu_custom_call.1} parent=0
    _
  %s12 = ssub.s32 1, %s10
  %s13 = scalar_select 0, %s12, %s10
  %14 = sst [smem:[#allocation2]] %s0
  $region1: #{tpu_custom_call.1} parent=0
    #allocation3 [shape = 'u8[8192]{0}', space=vmem, size = 0x2000, scoped, tag = 'input window, operand 1, single buffered']
    #allocation4 [shape = 's32[2]{0}', space=sflag, size = 0x8, scoped, tag = 'scoped memory for tpu_custom_call.1']
    #allocation5 [shape = 's32[2]{0}', space=sflag, size = 0x8, scoped, tag = 'scoped memory for tpu_custom_call.1']
    #allocation6 [shape = 'u8[8192]{0}', space=vmem, size = 0x2000, scoped, tag = 'input window, operand 2, single buffered']
    #allocation7 [shape = 's32[1]{0}', space=sflag, size = 0x4, scoped, tag = 'scoped memory for tpu_custom_call.1']
    #allocation8 [shape = 'u8[16384]{0}', space=vmem, size = 0x4000, scoped, tag = 'input window, operand 3']
    #allocation9 [shape = 'u8[16384]{0}', space=vmem, size = 0x4000, scoped, tag = 'output window, operand 0']
    #allocation10 [shape = 'u8[8192]{0}', space=vmem, size = 0x2000, scoped, tag = 'output window, operand 1, single buffered']
    #allocation11 [shape = 's32[1]{0}', space=sflag, size = 0x4, scoped, tag = 'scoped memory for tpu_custom_call.1']
    #allocation12 [shape = 'u8[8192]{0}', space=vmem, size = 0x2000, scoped, tag = 'output window, operand 2, single buffered']
    #allocation13 [shape = 'u8[8192]{0}', space=vmem, size = 0x2000, scoped, tag = 'output window, operand 3, single buffered']
    #allocation14 [shape = 's32[1]{0}', space=sflag, size = 0x4, scoped, tag = 'scoped memory for tpu_custom_call.1']
    #allocation15 [shape = 'u8[8192]{0}', space=vmem, size = 0x2000, scoped, tag = 'output window, operand 4, single buffered']
    %15 = vsyncpa [#allocation4], 0
    %16 = vsyncpa [#allocation7], 0
    %17 = vsyncpa [#allocation5], 0
    %s18 = scalar_lea.sflag [#allocation5], 1
    %19 = vsyncpa %s18, 0
    %20 = vsyncpa [#allocation11], 0
    %21 = vsyncpa [#allocation14], 0
    loop: start=0, step=1, limit=4
    $region2: #{tpu_custom_call.1} parent=1 // loop_pre_header
      _
    $region3: #{tpu_custom_call.1} parent=1 // loop_header
      %s23 = sphi 0, %s27
      %p24 = scmp.ge.s32.totalorder %s23, 4
      %s31 = sphi 0, %s31
      %s33 = sphi 0, %s31
      %s34 = sphi 0, %s33
      %s48 = sphi 0, %s34
      %s52 = sphi 0, %s52
      %s54 = sphi 0, %s52
      %s55 = sphi 0, %s54
      %s69 = sphi 0, %s55
      %s73 = sphi 0, %s73
      %s75 = sphi 0, %s73
      %s76 = sphi 0, %s75
      %s90 = sphi 0, %s76
      %s96 = sphi 0, %s98
      %s99 = sphi 0, %s96
      %s100 = sphi 0, %s99
      %s116 = sphi 0, %s100
      %s122 = sphi 0, %s124
      %s125 = sphi 0, %s122
      %s126 = sphi 0, %s125
      %s142 = sphi 0, %s126
      %s146 = sphi 0, %s146
      %s148 = sphi 0, %s146
      %s149 = sphi 0, %s148
      %s163 = sphi 0, %s149
      %s167 = sphi 0, %s167
      %s169 = sphi 0, %s167
      %s170 = sphi 0, %s169
      %s184 = sphi 0, %s170
      %s188 = sphi 0, %s188
      %s190 = sphi 0, %s188
      %s191 = sphi 0, %s190
      %s205 = sphi 0, %s191
      %s209 = sphi 0, %s209
      %s211 = sphi 0, %s209
      %s212 = sphi 0, %s211
      %s226 = sphi 0, %s212
    $region4: #{tpu_custom_call.1} parent=1 // loop_header_branch
      %26 = sbr.rel (%p24) target = $region8
    $region5: #{tpu_custom_call.1} parent=1 // loop_body
      %s28 = ssub.s32 %s23, 1
      %s29 = ssub.s32 %s23, 2
      %s30 = sadd.s32 %s23, 1
      %s32 = sadd.s32 %s31, 1
      %p35 = scmp.eq.s32.totalorder %s23, 1
      %p36 = scmp.ne.s32.totalorder %s31, %s33
      %p37 = scmp.eq.s32.totalorder %s23, 0
      %p38 = por %p36, %p37
      %p39 = scmp.ne.s32.totalorder %s31, %s33
      %p40 = scmp.eq.s32.totalorder %s28, 1
      %p41 = por %p39, %p40
      %p42 = scmp.ne.s32.totalorder %s33, %s34
      %p43 = scmp.eq.s32.totalorder %s28, 0
      %p44 = por %p42, %p43
      %p45 = scmp.ne.s32.totalorder %s33, %s34
      %p46 = scmp.eq.s32.totalorder %s29, 1
      %p47 = por %p45, %p46
      %p49 = scmp.ne.s32.totalorder %s34, %s48
      %p50 = scmp.eq.s32.totalorder %s29, 0
      %p51 = por %p49, %p50
      %s53 = sadd.s32 %s52, 1
      %p56 = scmp.eq.s32.totalorder %s23, 1
      %p57 = scmp.ne.s32.totalorder %s52, %s54
      %p58 = scmp.eq.s32.totalorder %s23, 0
      %p59 = por %p57, %p58
      %p60 = scmp.ne.s32.totalorder %s52, %s54
      %p61 = scmp.eq.s32.totalorder %s28, 1
      %p62 = por %p60, %p61
      %p63 = scmp.ne.s32.totalorder %s54, %s55
      %p64 = scmp.eq.s32.totalorder %s28, 0
      %p65 = por %p63, %p64
      %p66 = scmp.ne.s32.totalorder %s54, %s55
      %p67 = scmp.eq.s32.totalorder %s29, 1
      %p68 = por %p66, %p67
      %p70 = scmp.ne.s32.totalorder %s55, %s69
      %p71 = scmp.eq.s32.totalorder %s29, 0
      %p72 = por %p70, %p71
      %s74 = sadd.s32 %s73, 1
      %p77 = scmp.eq.s32.totalorder %s23, 1
      %p78 = scmp.ne.s32.totalorder %s73, %s75
      %p79 = scmp.eq.s32.totalorder %s23, 0
      %p80 = por %p78, %p79
      %p81 = scmp.ne.s32.totalorder %s73, %s75
      %p82 = scmp.eq.s32.totalorder %s28, 1
      %p83 = por %p81, %p82
      %p84 = scmp.ne.s32.totalorder %s75, %s76
      %p85 = scmp.eq.s32.totalorder %s28, 0
      %p86 = por %p84, %p85
      %p87 = scmp.ne.s32.totalorder %s75, %s76
      %p88 = scmp.eq.s32.totalorder %s29, 1
      %p89 = por %p87, %p88
      %p91 = scmp.ne.s32.totalorder %s76, %s90
      %p92 = scmp.eq.s32.totalorder %s29, 0
      %p93 = por %p91, %p92
      %s94 = ssub.s32 %s23, %s30
      %p95 = scmp.eq.s32.totalorder %s94, 0
      %s97 = sadd.s32 %s96, 1
      %s98 = scalar_select %p95, %s96, %s97
      %p101 = pneg %p95
      %p102 = scmp.eq.s32.totalorder %s23, 1
      %p103 = por %p101, %p102
      %p104 = scmp.ne.s32.totalorder %s96, %s99
      %p105 = scmp.eq.s32.totalorder %s23, 0
      %p106 = por %p104, %p105
      %p107 = scmp.ne.s32.totalorder %s96, %s99
      %p108 = scmp.eq.s32.totalorder %s28, 1
      %p109 = por %p107, %p108
      %p110 = scmp.ne.s32.totalorder %s99, %s100
      %p111 = scmp.eq.s32.totalorder %s28, 0
      %p112 = por %p110, %p111
      %p113 = scmp.ne.s32.totalorder %s99, %s100
      %p114 = scmp.eq.s32.totalorder %s29, 1
      %p115 = por %p113, %p114
      %p117 = scmp.ne.s32.totalorder %s100, %s116
      %p118 = scmp.eq.s32.totalorder %s29, 0
      %p119 = por %p117, %p118
      %s120 = ssub.s32 %s23, %s30
      %p121 = scmp.eq.s32.totalorder %s120, 0
      %s123 = sadd.s32 %s122, 1
      %s124 = scalar_select %p121, %s122, %s123
      %p127 = pneg %p121
      %p128 = scmp.eq.s32.totalorder %s23, 1
      %p129 = por %p127, %p128
      %p130 = scmp.ne.s32.totalorder %s122, %s125
      %p131 = scmp.eq.s32.totalorder %s23, 0
      %p132 = por %p130, %p131
      %p133 = scmp.ne.s32.totalorder %s122, %s125
      %p134 = scmp.eq.s32.totalorder %s28, 1
      %p135 = por %p133, %p134
      %p136 = scmp.ne.s32.totalorder %s125, %s126
      %p137 = scmp.eq.s32.totalorder %s28, 0
      %p138 = por %p136, %p137
      %p139 = scmp.ne.s32.totalorder %s125, %s126
      %p140 = scmp.eq.s32.totalorder %s29, 1
      %p141 = por %p139, %p140
      %p143 = scmp.ne.s32.totalorder %s126, %s142
      %p144 = scmp.eq.s32.totalorder %s29, 0
      %p145 = por %p143, %p144
      %s147 = sadd.s32 %s146, 1
      %p150 = scmp.eq.s32.totalorder %s23, 1
      %p151 = scmp.ne.s32.totalorder %s146, %s148
      %p152 = scmp.eq.s32.totalorder %s23, 0
      %p153 = por %p151, %p152
      %p154 = scmp.ne.s32.totalorder %s146, %s148
      %p155 = scmp.eq.s32.totalorder %s28, 1
      %p156 = por %p154, %p155
      %p157 = scmp.ne.s32.totalorder %s148, %s149
      %p158 = scmp.eq.s32.totalorder %s28, 0
      %p159 = por %p157, %p158
      %p160 = scmp.ne.s32.totalorder %s148, %s149
      %p161 = scmp.eq.s32.totalorder %s29, 1
      %p162 = por %p160, %p161
      %p164 = scmp.ne.s32.totalorder %s149, %s163
      %p165 = scmp.eq.s32.totalorder %s29, 0
      %p166 = por %p164, %p165
      %s168 = sadd.s32 %s167, 1
      %p171 = scmp.eq.s32.totalorder %s23, 1
      %p172 = scmp.ne.s32.totalorder %s167, %s169
      %p173 = scmp.eq.s32.totalorder %s23, 0
      %p174 = por %p172, %p173
      %p175 = scmp.ne.s32.totalorder %s167, %s169
      %p176 = scmp.eq.s32.totalorder %s28, 1
      %p177 = por %p175, %p176
      %p178 = scmp.ne.s32.totalorder %s169, %s170
      %p179 = scmp.eq.s32.totalorder %s28, 0
      %p180 = por %p178, %p179
      %p181 = scmp.ne.s32.totalorder %s169, %s170
      %p182 = scmp.eq.s32.totalorder %s29, 1
      %p183 = por %p181, %p182
      %p185 = scmp.ne.s32.totalorder %s170, %s184
      %p186 = scmp.eq.s32.totalorder %s29, 0
      %p187 = por %p185, %p186
      %s189 = sadd.s32 %s188, 1
      %p192 = scmp.eq.s32.totalorder %s23, 1
      %p193 = scmp.ne.s32.totalorder %s188, %s190
      %p194 = scmp.eq.s32.totalorder %s23, 0
      %p195 = por %p193, %p194
      %p196 = scmp.ne.s32.totalorder %s188, %s190
      %p197 = scmp.eq.s32.totalorder %s28, 1
      %p198 = por %p196, %p197
      %p199 = scmp.ne.s32.totalorder %s190, %s191
      %p200 = scmp.eq.s32.totalorder %s28, 0
      %p201 = por %p199, %p200
      %p202 = scmp.ne.s32.totalorder %s190, %s191
      %p203 = scmp.eq.s32.totalorder %s29, 1
      %p204 = por %p202, %p203
      %p206 = scmp.ne.s32.totalorder %s191, %s205
      %p207 = scmp.eq.s32.totalorder %s29, 0
      %p208 = por %p206, %p207
      %s210 = sadd.s32 %s209, 1
      %p213 = scmp.eq.s32.totalorder %s23, 1
      %p214 = scmp.ne.s32.totalorder %s209, %s211
      %p215 = scmp.eq.s32.totalorder %s23, 0
      %p216 = por %p214, %p215
      %p217 = scmp.ne.s32.totalorder %s209, %s211
      %p218 = scmp.eq.s32.totalorder %s28, 1
      %p219 = por %p217, %p218
      %p220 = scmp.ne.s32.totalorder %s211, %s212
      %p221 = scmp.eq.s32.totalorder %s28, 0
      %p222 = por %p220, %p221
      %p223 = scmp.ne.s32.totalorder %s211, %s212
      %p224 = scmp.eq.s32.totalorder %s29, 1
      %p225 = por %p223, %p224
      %p227 = scmp.ne.s32.totalorder %s212, %s226
      %p228 = scmp.eq.s32.totalorder %s29, 0
      %p229 = por %p227, %p228
      %p230 = scmp.le.s32.totalorder 1, %s23
      %p231 = scmp.lt.s32.totalorder %s23, 3
      %p232 = pnand %p230, %p231
      %p233 = pneg %p232
      // Predicated region
      $region9: #{tpu_custom_call.1} parent=5 // pred_check
        _
      $region10: #{tpu_custom_call.1} parent=5 // pred_check_branch
        %235 = sbr.rel (%p232) target = $region12
      $region11: #{tpu_custom_call.1} parent=5 // pred_region
        %s236 = ssub.s32 %s23, 1
        // Predicated region
        $region13: #{tpu_custom_call.1} parent=11 // pred_check
          %p237 = pneg %p44
        $region14: #{tpu_custom_call.1} parent=11 // pred_check_branch
          %239 = sbr.rel (%p237) target = $region16
        $region15: #{tpu_custom_call.1} parent=11 // pred_region
          _
        $region16: #{tpu_custom_call.1} parent=11 // pred_fallthru
          _
        // Predicated region
        $region17: #{tpu_custom_call.1} parent=11 // pred_check
          %p240 = pneg %p65
        $region18: #{tpu_custom_call.1} parent=11 // pred_check_branch
          %242 = sbr.rel (%p240) target = $region20
        $region19: #{tpu_custom_call.1} parent=11 // pred_region
          %244 = vsyncadd [#allocation4], 0
          %s245 = sshll.u32 %s1, 4
          %s246 = int_to_ptr.hbm [resolvable:$true] %s245
          %s247 = sshll.u32 [#allocation3], 4
          %s248 = int_to_ptr.vmem [resolvable:$true] %s247
          %253 = dma.hbm_to_vmem [thread:$0]  %s246, 256, %s248, [#allocation4], 128, 128, 8
        $region20: #{tpu_custom_call.1} parent=11 // pred_fallthru
          _
        // Predicated region
        $region21: #{tpu_custom_call.1} parent=11 // pred_check
          %p254 = pneg %p86
        $region22: #{tpu_custom_call.1} parent=11 // pred_check_branch
          %256 = sbr.rel (%p254) target = $region24
        $region23: #{tpu_custom_call.1} parent=11 // pred_region
          %258 = vsyncadd [#allocation7], 0
          %s259 = sshll.u32 %s2, 4
          %s260 = int_to_ptr.hbm [resolvable:$true] %s259
          %s261 = sshll.u32 [#allocation6], 4
          %s262 = int_to_ptr.vmem [resolvable:$true] %s261
          %267 = dma.hbm_to_vmem [thread:$0]  %s260, 256, %s262, [#allocation7], 128, 128, 8
        $region24: #{tpu_custom_call.1} parent=11 // pred_fallthru
          _
      $region12: #{tpu_custom_call.1} parent=5 // pred_fallthru
        _
      %p268 = scmp.lt.s32.totalorder %s23, 2
      // Predicated region
      $region25: #{tpu_custom_call.1} parent=5 // pred_check
        %p269 = pneg %p268
      $region26: #{tpu_custom_call.1} parent=5 // pred_check_branch
        %271 = sbr.rel (%p269) target = $region28
      $region27: #{tpu_custom_call.1} parent=5 // pred_region
        // Predicated region
        $region29: #{tpu_custom_call.1} parent=27 // pred_check
          %p272 = pneg %p106
        $region30: #{tpu_custom_call.1} parent=27 // pred_check_branch
          %274 = sbr.rel (%p272) target = $region32
        $region31: #{tpu_custom_call.1} parent=27 // pred_region
          %s275 = sand.u32 %s23, 1
          %s276 = scalar_lea.sflag [#allocation4], %s275
          %s277 = sand.u32 %s96, 1
          %s278 = smul.addr %s277, 16
          %s279 = scalar_lea.vmem [#allocation8], %s278
          %281 = vsyncadd %s276, 0
          %s282 = smul.addr %s23, 2
          %s283 = smul.addr %s282, 8
          %s284 = scalar_lea.hbm %s3, %s283
          %s285 = sshll.u32 %s284, 4
          %s286 = int_to_ptr.hbm [resolvable:$true] %s285
          %s287 = sshll.u32 %s279, 4
          %s288 = int_to_ptr.vmem [resolvable:$true] %s287
          %293 = dma.hbm_to_vmem [thread:$0]  %s286, 256, %s288, %s276, 128, 128, 8
        $region32: #{tpu_custom_call.1} parent=27 // pred_fallthru
          _
      $region28: #{tpu_custom_call.1} parent=5 // pred_fallthru
        _
      %p294 = scmp.le.s32.totalorder 1, %s23
      %p295 = scmp.lt.s32.totalorder %s23, 3
      %p296 = pnand %p294, %p295
      %p297 = pneg %p296
      // Predicated region
      $region33: #{tpu_custom_call.1} parent=5 // pred_check
        _
      $region34: #{tpu_custom_call.1} parent=5 // pred_check_branch
        %299 = sbr.rel (%p296) target = $region36
      $region35: #{tpu_custom_call.1} parent=5 // pred_region
        %s300 = ssub.s32 %s23, 1
        // Predicated region
        $region37: #{tpu_custom_call.1} parent=35 // pred_check
          %p301 = pneg %p65
        $region38: #{tpu_custom_call.1} parent=35 // pred_check_branch
          %303 = sbr.rel (%p301) target = $region40
        $region39: #{tpu_custom_call.1} parent=35 // pred_region
          %305 = dma.done [#allocation4], 256
        $region40: #{tpu_custom_call.1} parent=35 // pred_fallthru
          _
        // Predicated region
        $region41: #{tpu_custom_call.1} parent=35 // pred_check
          %p306 = pneg %p86
        $region42: #{tpu_custom_call.1} parent=35 // pred_check_branch
          %308 = sbr.rel (%p306) target = $region44
        $region43: #{tpu_custom_call.1} parent=35 // pred_region
          %310 = dma.done [#allocation7], 256
        $region44: #{tpu_custom_call.1} parent=35 // pred_fallthru
          _
        %s311 = sand.u32 %s28, 1
        %s312 = scalar_lea.sflag [#allocation4], %s311
        %s313 = sand.u32 %s99, 1
        %s314 = smul.addr %s313, 16
        %s315 = scalar_lea.vmem [#allocation8], %s314
        // Predicated region
        $region45: #{tpu_custom_call.1} parent=35 // pred_check
          %p316 = pneg %p112
        $region46: #{tpu_custom_call.1} parent=35 // pred_check_branch
          %318 = sbr.rel (%p316) target = $region48
        $region47: #{tpu_custom_call.1} parent=35 // pred_region
          %320 = dma.done %s312, 256
        $region48: #{tpu_custom_call.1} parent=35 // pred_fallthru
          _
        %p321 = pneg %p44
        %p322 = pneg %p41
        %p323 = pneg %p65
        %p324 = pneg %p62
        %p325 = pneg %p86
        %p326 = pneg %p83
        %s327 = sand.u32 %s28, 1
        %s328 = scalar_lea.sflag [#allocation4], %s327
        %s329 = sand.u32 %s99, 1
        %s330 = smul.addr %s329, 16
        %s331 = scalar_lea.vmem [#allocation8], %s330
        %p332 = pneg %p112
        %p333 = pneg %p109
        %p334 = pneg %p138
        %p335 = pneg %p135
        %s336 = sand.u32 %s125, 1
        %s337 = scalar_lea.sflag [#allocation5], %s336
        %s338 = sand.u32 %s125, 1
        %s339 = smul.addr %s338, 16
        %s340 = scalar_lea.vmem [#allocation9], %s339
        %p341 = pneg %p159
        %p342 = pneg %p156
        %p343 = pneg %p180
        %p344 = pneg %p177
        %p345 = pneg %p201
        %p346 = pneg %p198
        %p347 = pneg %p222
        %p348 = pneg %p219
        %p349 = scmp.eq.s32.totalorder %s28, 0
        // Predicated region
        $region49: #{tpu_custom_call.1} parent=35 // pred_check
          %p350 = pneg %p349
        $region50: #{tpu_custom_call.1} parent=35 // pred_check_branch
          %352 = sbr.rel (%p350) target = $region52
        $region51: #{tpu_custom_call.1} parent=35 // pred_region
          %s353 = sld [smem:[#allocation2]]
          %v354 = vld [vmem:[#allocation3] sm:$0xff]
          %v355 = vld [vmem:[#allocation3 + $0x8] sm:$0xff]
          %v356 = vmul.f32 %v354, -5.0
          %v357 = vmul.f32 %v355, -5.0
          %v358 = vmul.f32 %v356, 1.442695
          %v359 = vpow.pop %v358
          %v360 = vmul.f32 %v357, 1.442695
          %v361 = vpow.pop %v360
          %v362 = vadd.f32 %v359, 1.0
          %v363 = vadd.f32 %v361, 1.0
          %v364 = vrcp.pop %v362
          %v365 = vmul.f32 %v362, %v364
          %v366 = vsub.f32 1.0, %v365
          %v367 = vmul.f32 %v364, %v366
          %v368 = vadd.f32 %v364, %v367
          %vm369 = vweird.f32 %v362
          %vm370 = vweird.f32 %v364
          %vm371 = vmor %vm369, %vm370
          %v372 = vsel %vm371, %v364, %v368
          %v373 = vand.u32 2147483647, %v362
          %vm374 = vcmp.eq.f32.partialorder %v373, 8.507059e+37
          %v375 = vand.u32 %v362, 2147483648
          %v376 = vor.u32 1.1754944e-38, %v375
          %v377 = vsel %vm374, %v376, %v372
          %v378 = vmul.f32 1.0, %v377
          %v379 = vrcp.pop %v363
          %v380 = vmul.f32 %v363, %v379
          %v381 = vsub.f32 1.0, %v380
          %v382 = vmul.f32 %v379, %v381
          %v383 = vadd.f32 %v379, %v382
          %vm384 = vweird.f32 %v363
          %vm385 = vweird.f32 %v379
          %vm386 = vmor %vm384, %vm385
          %v387 = vsel %vm386, %v379, %v383
          %v388 = vand.u32 2147483647, %v363
          %vm389 = vcmp.eq.f32.partialorder %v388, 8.507059e+37
          %v390 = vand.u32 %v363, 2147483648
          %v391 = vor.u32 1.1754944e-38, %v390
          %v392 = vsel %vm389, %v391, %v387
          %v393 = vmul.f32 1.0, %v392
          %vm394 = vcmask 261120
          %395 = vst.msk [vmem:[#allocation10] sm:$0xff] %vm394, %v378
          %396 = vst.msk [vmem:[#allocation10 + $0x8] sm:$0xff] %vm394, %v393
          %v397 = vsel %vm394, %v378, 0.0
          %v398 = vsel %vm394, %v393, 0.0
          %v399 = vadd.f32 %v397, %v398
          %400 = vadd.xlane.f32.xlu0 %v399
          %v401 = vpop.xlane.xlu0 %400
          %v402 = vrot.slane %v401, 4
          %v403 = vadd.f32 %v401, %v402
          %v404 = vrot.slane %v403, 2
          %v405 = vadd.f32 %v403, %v404
          %v406 = vrot.slane %v405, 1
          %v407 = vadd.f32 %v405, %v406
          %s408 = vtos %v407
          %v409 = vrcp.pop 512.0
          %v410 = vmul.f32 512.0, %v409
          %v411 = vsub.f32 1.0, %v410
          %v412 = vmul.f32 %v409, %v411
          %v413 = vadd.f32 %v409, %v412
          %vm414 = vweird.f32 %v409
          %v415 = vsel %vm414, %v409, %v413
          %s416 = vtos %v415
          %s417 = smul.f32 %s408, %s416
          %v418 = vstv %s417
          %v419 = vrcp.pop %v418
          %v420 = vmul.f32 %v418, %v419
          %v421 = vsub.f32 1.0, %v420
          %v422 = vmul.f32 %v419, %v421
          %v423 = vadd.f32 %v419, %v422
          %vm424 = vweird.f32 %v418
          %vm425 = vweird.f32 %v419
          %vm426 = vmor %vm424, %vm425
          %v427 = vsel %vm426, %v419, %v423
          %v428 = vand.u32 2147483647, %v418
          %vm429 = vcmp.eq.f32.partialorder %v428, 8.507059e+37
          %v430 = vand.u32 %v418, 2147483648
          %v431 = vor.u32 1.1754944e-38, %v430
          %v432 = vsel %vm429, %v431, %v427
          %s433 = vtos %v432
          %s434 = smul.f32 %s353, %s433
          %s435 = ssub.f32 1.0, %s353
          %s436 = ssub.f32 1.0, %s417
          %v437 = vstv %s436
          %v438 = vrcp.pop %v437
          %v439 = vmul.f32 %v437, %v438
          %v440 = vsub.f32 1.0, %v439
          %v441 = vmul.f32 %v438, %v440
          %v442 = vadd.f32 %v438, %v441
          %vm443 = vweird.f32 %v437
          %vm444 = vweird.f32 %v438
          %vm445 = vmor %vm443, %vm444
          %v446 = vsel %vm445, %v438, %v442
          %v447 = vand.u32 2147483647, %v437
          %vm448 = vcmp.eq.f32.partialorder %v447, 8.507059e+37
          %v449 = vand.u32 %v437, 2147483648
          %v450 = vor.u32 1.1754944e-38, %v449
          %v451 = vsel %vm448, %v450, %v446
          %s452 = vtos %v451
          %s453 = smul.f32 %s435, %s452
          %p454 = scmp.le.f32.partialorder %s434, 1.0
          %v455 = vstv %s434
          %v456 = vmul.f32 %v378, %v455
          %v457 = vmul.f32 %v393, %v455
          %v458 = vsub.f32 1.0, %v378
          %v459 = vsub.f32 1.0, %v393
          %v460 = vstv %s453
          %v461 = vmul.f32 %v458, %v460
          %v462 = vmul.f32 %v459, %v460
          %v463 = vsub.f32 1.0, %v461
          %v464 = vsub.f32 1.0, %v462
          %s465 = scalar_select %p454, 1, 0
          %v466 = vstv %s465
          %vm467 = vcmp.eq.s32.totalorder %v466, 1
          %v468 = vsel %vm467, %v456, %v463
          %v469 = vsel %vm467, %v457, %v464
          %470 = vst.msk [vmem:[#allocation12] sm:$0xff] %vm394, %v468
          %471 = vst.msk [vmem:[#allocation12 + $0x8] sm:$0xff] %vm394, %v469
          %v472 = vld [vmem:[#allocation6] sm:$0xff]
          %v473 = vld [vmem:[#allocation6 + $0x8] sm:$0xff]
          %vm474 = vcmp.gt.f32.partialorder %v468, %v472
          %vm475 = vcmp.gt.f32.partialorder %v469, %v473
          %v476 = vsel %vm474, 1, 0
          %v477 = vsel %vm475, 1, 0
          %v478 = vcvt.s32.f32 %v476
          %v479 = vcvt.s32.f32 %v477
          %480 = vst.msk [vmem:[#allocation13] sm:$0xff] %vm394, %v478
          %481 = vst.msk [vmem:[#allocation13 + $0x8] sm:$0xff] %vm394, %v479
          %v482 = vadd.f32 %v468, 1e-10
          %v483 = vadd.f32 %v469, 1e-10
          %v484 = vlog2.pop %v482
          %v485 = vmul.f32 %v484, 0.6931472
          %v486 = vlog2.pop %v483
          %v487 = vmul.f32 %v486, 0.6931472
          %v488 = vmul.f32 %v468, %v485
          %v489 = vmul.f32 %v469, %v487
          %v490 = vsub.f32 1.0, %v468
          %v491 = vsub.f32 1.0, %v469
          %v492 = vadd.f32 %v490, 1e-10
          %v493 = vadd.f32 %v491, 1e-10
          %v494 = vlog2.pop %v492
          %v495 = vmul.f32 %v494, 0.6931472
          %v496 = vlog2.pop %v493
          %v497 = vmul.f32 %v496, 0.6931472
          %v498 = vmul.f32 %v490, %v495
          %v499 = vmul.f32 %v491, %v497
          %v500 = vadd.f32 %v488, %v498
          %v501 = vadd.f32 %v489, %v499
          %502 = vst.msk [vmem:[#allocation15] sm:$0xff] %vm394, %v500
          %503 = vst.msk [vmem:[#allocation15 + $0x8] sm:$0xff] %vm394, %v501
        $region52: #{tpu_custom_call.1} parent=35 // pred_fallthru
          _
        %v504 = vld [vmem:[#allocation13] sm:$0xff]
        %v505 = vld [vmem:[#allocation13 + $0x8] sm:$0xff]
        %v506 = vld [vmem:[%s315] sm:$0xff]
        %v507 = vld [vmem:[%s315 + $0x8] sm:$0xff]
        %v508 = vmul.f32 %v504, %v506
        %v509 = vmul.f32 %v505, %v507
        %vm510 = vcmask 261120
        %511 = vst.msk [vmem:[%s340] sm:$0xff] %vm510, %v508
        %512 = vst.msk [vmem:[%s340 + $0x8] sm:$0xff] %vm510, %v509
        %s513 = sand.u32 %s125, 1
        %s514 = scalar_lea.sflag [#allocation5], %s513
        %s515 = sand.u32 %s125, 1
        %s516 = smul.addr %s515, 16
        %s517 = scalar_lea.vmem [#allocation9], %s516
        // Predicated region
        $region53: #{tpu_custom_call.1} parent=35 // pred_check
          %p518 = pneg %p135
        $region54: #{tpu_custom_call.1} parent=35 // pred_check_branch
          %520 = sbr.rel (%p518) target = $region56
        $region55: #{tpu_custom_call.1} parent=35 // pred_region
          %522 = vsyncadd %s514, 0
          %s523 = smul.addr %s28, 2
          %s524 = smul.addr %s523, 8
          %s525 = scalar_lea.hbm %s4, %s524
          %s526 = sshll.u32 %s517, 4
          %s527 = int_to_ptr.vmem [resolvable:$true] %s526
          %s528 = sshll.u32 %s525, 4
          %s529 = int_to_ptr.hbm [resolvable:$true] %s528
          %534 = dma.vmem_to_hbm [thread:$0]  %s527, 256, %s529, %s514, 128, 128, 8
        $region56: #{tpu_custom_call.1} parent=35 // pred_fallthru
          _
        // Predicated region
        $region57: #{tpu_custom_call.1} parent=35 // pred_check
          %p535 = pneg %p156
        $region58: #{tpu_custom_call.1} parent=35 // pred_check_branch
          %537 = sbr.rel (%p535) target = $region60
        $region59: #{tpu_custom_call.1} parent=35 // pred_region
          %539 = vsyncadd [#allocation11], 0
          %s540 = sshll.u32 [#allocation10], 4
          %s541 = int_to_ptr.vmem [resolvable:$true] %s540
          %s542 = sshll.u32 %s5, 4
          %s543 = int_to_ptr.hbm [resolvable:$true] %s542
          %548 = dma.vmem_to_hbm [thread:$0]  %s541, 256, %s543, [#allocation11], 128, 128, 8
        $region60: #{tpu_custom_call.1} parent=35 // pred_fallthru
          _
        // Predicated region
        $region61: #{tpu_custom_call.1} parent=35 // pred_check
          %p549 = pneg %p177
        $region62: #{tpu_custom_call.1} parent=35 // pred_check_branch
          %551 = sbr.rel (%p549) target = $region64
        $region63: #{tpu_custom_call.1} parent=35 // pred_region
          %553 = vsyncadd [#allocation11], 0
          %s554 = sshll.u32 [#allocation12], 4
          %s555 = int_to_ptr.vmem [resolvable:$true] %s554
          %s556 = sshll.u32 %s6, 4
          %s557 = int_to_ptr.hbm [resolvable:$true] %s556
          %562 = dma.vmem_to_hbm [thread:$0]  %s555, 256, %s557, [#allocation11], 128, 128, 8
        $region64: #{tpu_custom_call.1} parent=35 // pred_fallthru
          _
        // Predicated region
        $region65: #{tpu_custom_call.1} parent=35 // pred_check
          %p563 = pneg %p198
        $region66: #{tpu_custom_call.1} parent=35 // pred_check_branch
          %565 = sbr.rel (%p563) target = $region68
        $region67: #{tpu_custom_call.1} parent=35 // pred_region
          %567 = vsyncadd [#allocation14], 0
          %s568 = sshll.u32 [#allocation13], 4
          %s569 = int_to_ptr.vmem [resolvable:$true] %s568
          %s570 = sshll.u32 %s7, 4
          %s571 = int_to_ptr.hbm [resolvable:$true] %s570
          %576 = dma.vmem_to_hbm [thread:$0]  %s569, 256, %s571, [#allocation14], 128, 128, 8
        $region68: #{tpu_custom_call.1} parent=35 // pred_fallthru
          _
        // Predicated region
        $region69: #{tpu_custom_call.1} parent=35 // pred_check
          %p577 = pneg %p219
        $region70: #{tpu_custom_call.1} parent=35 // pred_check_branch
          %579 = sbr.rel (%p577) target = $region72
        $region71: #{tpu_custom_call.1} parent=35 // pred_region
          %581 = vsyncadd [#allocation14], 0
          %s582 = sshll.u32 [#allocation15], 4
          %s583 = int_to_ptr.vmem [resolvable:$true] %s582
          %s584 = sshll.u32 %s8, 4
          %s585 = int_to_ptr.hbm [resolvable:$true] %s584
          %590 = dma.vmem_to_hbm [thread:$0]  %s583, 256, %s585, [#allocation14], 128, 128, 8
        $region72: #{tpu_custom_call.1} parent=35 // pred_fallthru
          _
        // Predicated region
        $region73: #{tpu_custom_call.1} parent=35 // pred_check
          %p591 = pneg %p156
        $region74: #{tpu_custom_call.1} parent=35 // pred_check_branch
          %593 = sbr.rel (%p591) target = $region76
        $region75: #{tpu_custom_call.1} parent=35 // pred_region
          %595 = dma.done [#allocation11], 256
        $region76: #{tpu_custom_call.1} parent=35 // pred_fallthru
          _
        // Predicated region
        $region77: #{tpu_custom_call.1} parent=35 // pred_check
          %p596 = pneg %p177
        $region78: #{tpu_custom_call.1} parent=35 // pred_check_branch
          %598 = sbr.rel (%p596) target = $region80
        $region79: #{tpu_custom_call.1} parent=35 // pred_region
          %600 = dma.done [#allocation11], 256
        $region80: #{tpu_custom_call.1} parent=35 // pred_fallthru
          _
        // Predicated region
        $region81: #{tpu_custom_call.1} parent=35 // pred_check
          %p601 = pneg %p198
        $region82: #{tpu_custom_call.1} parent=35 // pred_check_branch
          %603 = sbr.rel (%p601) target = $region84
        $region83: #{tpu_custom_call.1} parent=35 // pred_region
          %605 = dma.done [#allocation14], 256
        $region84: #{tpu_custom_call.1} parent=35 // pred_fallthru
          _
        // Predicated region
        $region85: #{tpu_custom_call.1} parent=35 // pred_check
          %p606 = pneg %p219
        $region86: #{tpu_custom_call.1} parent=35 // pred_check_branch
          %608 = sbr.rel (%p606) target = $region88
        $region87: #{tpu_custom_call.1} parent=35 // pred_region
          %610 = dma.done [#allocation14], 256
        $region88: #{tpu_custom_call.1} parent=35 // pred_fallthru
          _
      $region36: #{tpu_custom_call.1} parent=5 // pred_fallthru
        _
      %p611 = scmp.le.s32.totalorder 2, %s23
      // Predicated region
      $region89: #{tpu_custom_call.1} parent=5 // pred_check
        %p612 = pneg %p611
      $region90: #{tpu_custom_call.1} parent=5 // pred_check_branch
        %614 = sbr.rel (%p612) target = $region92
      $region91: #{tpu_custom_call.1} parent=5 // pred_region
        %s615 = ssub.s32 %s23, 2
        // Predicated region
        $region93: #{tpu_custom_call.1} parent=91 // pred_check
          %p616 = pneg %p141
        $region94: #{tpu_custom_call.1} parent=91 // pred_check_branch
          %618 = sbr.rel (%p616) target = $region96
        $region95: #{tpu_custom_call.1} parent=91 // pred_region
          %s619 = sand.u32 %s126, 1
          %s620 = scalar_lea.sflag [#allocation5], %s619
          %s621 = sand.u32 %s126, 1
          %s622 = smul.addr %s621, 16
          %s623 = scalar_lea.vmem [#allocation9], %s622
          %625 = dma.done %s620, 256
        $region96: #{tpu_custom_call.1} parent=91 // pred_fallthru
          _
      $region92: #{tpu_custom_call.1} parent=5 // pred_fallthru
        _
    $region6: #{tpu_custom_call.1} parent=1 // loop_footer
      %s27 = sadd.s32 1, %s23
    $region7: #{tpu_custom_call.1} parent=1 // loop_footer_branch
      %22 = sbr.rel target = $region3
    $region8: #{tpu_custom_call.1} parent=1 // loop_exit
      _
    %626 = vsyncpa [#allocation4], 1
    %s627 = scalar_lea.sflag [#allocation4], 1
    %628 = vsyncpa %s627, 1
    %629 = vsyncpa [#allocation7], 1
    %630 = vsyncpa [#allocation5], 1
    %s631 = scalar_lea.sflag [#allocation5], 1
    %632 = vsyncpa %s631, 1
    %633 = vsyncpa [#allocation11], 1
    %634 = vsyncpa [#allocation14], 1

</llo_original>
